<compile_context>
chip_gen: v5e
topology: v5e:2x2
jax: 0.10.0
libtpu: 0.0.40
codegen_flags: <defaults>
</compile_context>

<pallas_src>
import functools
import math

import jax
import jax.numpy as jnp
from jax import lax
from jax.experimental import pallas as pl
from jax.experimental.pallas import tpu as pltpu


def _round_up(a, b):
    return (a + b - 1) // b * b


# ---------------------------------------------------------------------------
# Stage 1: ft_input = x @ W, tiled over row blocks, W VMEM-resident.
# Emits an f32 copy (exact left half of the output) and a bf16 copy (the
# stage-2 reduction operand: half the HBM re-read traffic, native bf16 MXU).
# ---------------------------------------------------------------------------
def _xw_kernel(x_ref, w_ref, fti_ref, xw_ref):
    ft = jnp.dot(x_ref[...], w_ref[...], preferred_element_type=jnp.float32)
    fti_ref[...] = ft
    xw_ref[...] = ft.astype(xw_ref.dtype)


# ---------------------------------------------------------------------------
# Stage 2 (fused):  out[:, :F] = ft_input ;  out[:, F:] = adj @ xw
# grid = (row blocks, reduction blocks); reduction axis last + "arbitrary";
# f32 VMEM accumulator initialised at k==0, epilogue (incl. fused concat)
# written at k==last while the (bm, 2F) output block is still VMEM-resident.
# ---------------------------------------------------------------------------
def _neighbor_kernel(adj_ref, xw_ref, fti_ref, out_ref, acc_ref, *,
                     bk, n, n_pad, f_out, xw_resident):
    k = pl.program_id(1)

    @pl.when(k == 0)
    def _():
        acc_ref[...] = jnp.zeros_like(acc_ref)

    if xw_resident:
        # Whole ft_input slab is VMEM-resident (constant index_map); slice the
        # current reduction chunk out of it -> no per-(i,k) HBM re-read.
        start = pl.multiple_of(k * bk, bk)
        xw_blk = xw_ref[pl.ds(start, bk), :]
    else:
        xw_blk = xw_ref[...]

    adj_blk = adj_ref[...]
    if adj_blk.dtype != xw_blk.dtype:
        # int8 / bf16 adjacency storage -> cast to the matmul operand dtype
        # (VPU cast, hidden under the adj DMA).
        adj_blk = adj_blk.astype(xw_blk.dtype)

    if n != n_pad:
        # adj is intentionally NOT padded in HBM.  Zero the out-of-range
        # columns of the tail reduction block so unspecified block padding
        # can never reach the accumulator.
        col = lax.broadcasted_iota(jnp.int32, adj_blk.shape, 1)
        adj_blk = jnp.where(col + k * bk < n, adj_blk, jnp.zeros_like(adj_blk))

    # Native-dtype MXU matmul (bf16 x bf16 on the fast path), f32 accumulate.
    acc_ref[...] += jnp.dot(adj_blk, xw_blk, preferred_element_type=jnp.float32)

    @pl.when(k == pl.num_programs(1) - 1)
    def _():
        # Fused concat: the output block is (bm, 2*f_out) and resident across
        # k, so both halves are written once per row block (lane-dense HBM
        # writeback, no wrapper-side concatenate pass).
        out_ref[:, :f_out] = fti_ref[...].astype(out_ref.dtype)
        out_ref[:, f_out:] = acc_ref[...].astype(out_ref.dtype)


@functools.partial(jax.jit,
                   static_argnames=("block_rows", "block_k", "exact_f32"))
def sage_layer(x, adj, weight, *, block_rows=1024, block_k=512,
               exact_f32=False):
    """Pallas implementation of SAGELayer.forward (bias=False).

    x      : [N, F_in]   float32
    adj    : [N, N]      dense adjacency.  bf16 or int8 storage is exact for
                         0/1 adjacency and halves/quarters the dominant HBM
                         stream; for a normalized f32 adjacency pass f32 and
                         exact_f32=True to keep the aggregation in f32.
    weight : [F_in, F_out] float32
    returns: [N, 2*F_out] float32  ([:, :F] = x@W,  [:, F:] = (adj@x)@W)
    """
    n, f_in = x.shape
    f_out = weight.shape[1]
    assert adj.shape == (n, n)
    assert weight.shape == (f_in, f_out)

    # ---- tile selection -----------------------------------------------------
    if n <= block_rows:
        # Small graph: single tile per axis (block == full array dims).
        bm = bk = n
        n_pad = n
        xw_resident = False
    else:
        assert block_rows % 8 == 0 and block_k % 128 == 0, (
            "block_rows must be a multiple of 8 and block_k a multiple of 128")
        bm, bk = block_rows, block_k
        n_pad = _round_up(n, math.lcm(bm, bk))
        # Keep the whole ft_input slab VMEM-resident when it is small enough
        # (eliminates the xw re-read stream; plenty of headroom on 64 MiB v7x).
        xw_itemsize = 4 if exact_f32 else 2
        xw_resident = 2 * n_pad * f_out * xw_itemsize <= 16 * 1024 * 1024

    if n_pad != n:
        # Pad only the cheap [N, F] operands; adj (the N^2 operand) is never
        # padded — its tail blocks are masked inside the kernel instead.
        x = jnp.pad(x, ((0, n_pad - n), (0, 0)))

    grid_rows = n_pad // bm
    grid_k = n_pad // bk

    # ---- Stage 1: ft_input = x @ W -----------------------------------------
    ft_input, xw_bf16 = pl.pallas_call(
        _xw_kernel,
        out_shape=(jax.ShapeDtypeStruct((n_pad, f_out), jnp.float32),
                   jax.ShapeDtypeStruct((n_pad, f_out), jnp.bfloat16)),
        grid_spec=pltpu.PrefetchScalarGridSpec(
            num_scalar_prefetch=0,
            grid=(grid_rows,),
            in_specs=[pl.BlockSpec((bm, f_in), lambda i: (i, 0)),
                      pl.BlockSpec((f_in, f_out), lambda i: (0, 0))],  # W resident
            out_specs=(pl.BlockSpec((bm, f_out), lambda i: (i, 0)),
                       pl.BlockSpec((bm, f_out), lambda i: (i, 0))),
        ),
        compiler_params=pltpu.CompilerParams(
            dimension_semantics=("parallel",)),
    )(x, weight)

    # Stage-2 reduction operand: bf16 fast path, or the f32 ft_input itself
    # when exact f32 aggregation is requested.
    xw_op = ft_input if exact_f32 else xw_bf16

    if xw_resident:
        xw_spec = pl.BlockSpec((n_pad, f_out), lambda i, k: (0, 0))
    else:
        xw_spec = pl.BlockSpec((bk, f_out), lambda i, k: (k, 0))

    # ---- explicit VMEM budget (sized for v7x's 64 MiB / 32 MiB scoped) -----
    adj_itemsize = jnp.dtype(adj.dtype).itemsize
    xw_itemsize = jnp.dtype(xw_op.dtype).itemsize
    vmem_est = (2 * bm * bk * adj_itemsize                      # adj (2 bufs)
                + (2 * n_pad if xw_resident else 2 * bk) * f_out * xw_itemsize
                + 2 * bm * f_out * 4                            # fti (2 bufs)
                + 2 * bm * 2 * f_out * 4                        # out (2 bufs)
                + bm * f_out * 4)                               # accumulator
    vmem_limit = int(min(48 * 2 ** 20, max(32 * 2 ** 20, vmem_est + 8 * 2 ** 20)))

    kernel = functools.partial(_neighbor_kernel, bk=bk, n=n, n_pad=n_pad,
                               f_out=f_out, xw_resident=xw_resident)

    # ---- Stage 2: fused aggregation + concat --------------------------------
    # Row axis "parallel" (shards across the 2 TensorCores on v7x — best when
    # grid_rows is even), reduction axis last + "arbitrary".
    out = pl.pallas_call(
        kernel,
        out_shape=jax.ShapeDtypeStruct((n_pad, 2 * f_out), jnp.float32),
        grid_spec=pltpu.PrefetchScalarGridSpec(
            num_scalar_prefetch=0,
            grid=(grid_rows, grid_k),
            in_specs=[pl.BlockSpec((bm, bk), lambda i, k: (i, k)),   # adj stream
                      xw_spec,                                       # reduction operand
                      pl.BlockSpec((bm, f_out), lambda i, k: (i, 0))],  # f32 left half
            out_specs=pl.BlockSpec((bm, 2 * f_out), lambda i, k: (i, 0)),
            scratch_shapes=[pltpu.VMEM((bm, f_out), jnp.float32)],
        ),
        compiler_params=pltpu.CompilerParams(
            dimension_semantics=("parallel", "arbitrary"),
            vmem_limit_bytes=vmem_limit),
    )(adj, xw_op, ft_input)

    return out[:n] if n_pad != n else out


def sage_reference(x, adj, weight):
    """Pure-JAX reference for the PyTorch forward (full f32 precision)."""
    hp = lax.Precision.HIGHEST
    ft_input = jnp.dot(x, weight, precision=hp)
    neighbor = jnp.dot(adj, x, precision=hp)
    ft_neighbor = jnp.dot(neighbor, weight, precision=hp)
    return jnp.concatenate([ft_input, ft_neighbor], axis=1)


if __name__ == "__main__":
    hp = lax.Precision.HIGHEST

    def make_inputs(key, n, f_in, f_out):
        k_x, k_adj, k_w = jax.random.split(key, 3)
        x = jax.random.normal(k_x, (n, f_in), dtype=jnp.float32)
        a = (jax.random.uniform(k_adj, (n, n)) > 0.7).astype(jnp.float32)
        adj = jnp.minimum(a + a.T + jnp.eye(n, dtype=jnp.float32), 1.0)
        # reset_parameters(): U(-stdv, stdv), stdv = 1/sqrt(out_features)
        stdv = 1.0 / math.sqrt(f_out)
        w = jax.random.uniform(k_w, (f_in, f_out), dtype=jnp.float32,
                               minval=-stdv, maxval=stdv)
        return x, adj, w

    key0 = jax.random.PRNGKey(0)
    key1, key2 = jax.random.split(key0, 2)

    # ---- Test 1: single-tile path, bf16 0/1 adjacency (exact storage) ------
    N, F_IN, F_OUT = 16, 32, 32
    x, adj, w = make_inputs(key1, N, F_IN, F_OUT)
    out = jax.block_until_ready(sage_layer(x, adj.astype(jnp.bfloat16), w))
    ref = sage_reference(x, adj, w)
    xw_b = jnp.dot(x, w, precision=hp).astype(jnp.bfloat16).astype(jnp.float32)
    ref_right_b = jnp.dot(adj, xw_b, precision=hp)   # bf16-operand-aware ref
    assert out.shape == (N, 2 * F_OUT), out.shape
    assert jnp.allclose(out[:, :F_OUT], ref[:, :F_OUT], atol=1e-4, rtol=1e-4)
    assert jnp.allclose(out[:, F_OUT:], ref_right_b, atol=1e-3, rtol=1e-3)
    assert jnp.allclose(out[:, F_OUT:], ref[:, F_OUT:], atol=5e-2, rtol=5e-2)

    # ---- Test 2: tiled path (multi row/k blocks, tail masking, un-padded adj,
    #              VMEM-resident ft_input slab) -------------------------------
    N2 = 200
    x2, adj2, w2 = make_inputs(key2, N2, F_IN, F_OUT)
    out2 = jax.block_until_ready(
        sage_layer(x2, adj2.astype(jnp.bfloat16), w2,
                   block_rows=128, block_k=128))
    ref2 = sage_reference(x2, adj2, w2)
    xw2_b = jnp.dot(x2, w2, precision=hp).astype(jnp.bfloat16).astype(jnp.float32)
    ref2_right_b = jnp.dot(adj2, xw2_b, precision=hp)
    assert out2.shape == (N2, 2 * F_OUT), out2.shape
    assert jnp.allclose(out2[:, :F_OUT], ref2[:, :F_OUT], atol=1e-4, rtol=1e-4)
    assert jnp.allclose(out2[:, F_OUT:], ref2_right_b, atol=1e-3, rtol=1e-3)

    # ---- Test 3: exact-f32 aggregation path (e.g. normalized adjacency) ----
    out3 = jax.block_until_ready(sage_layer(x, adj, w, exact_f32=True))
    assert jnp.allclose(out3, ref, atol=1e-4, rtol=1e-4)

    print("KERNEL_OK")
</pallas_src>

<mosaic_0001>
module attributes {stable_mosaic.version = 11 : i64} {
  func.func @_xw_kernel(%arg0: i32, %arg1: memref<16x32xf32, #tpu.memory_space<vmem>>, %arg2: memref<32x32xf32, #tpu.memory_space<vmem>>, %arg3: memref<16x32xf32, #tpu.memory_space<vmem>>, %arg4: memref<16x32xbf16, #tpu.memory_space<vmem>>) attributes {dimension_semantics = [#tpu.dimension_semantics<parallel>], iteration_bounds = array<i64: 1>, scalar_prefetch = 0 : i64, scratch_operands = 0 : i64, tpu.core_type = #tpu.core_type<tc>, window_params = [{transform_indices = @transform_0, window_bounds = array<i64: 16, 32>}, {pipeline_mode = #tpu.pipeline_mode<synchronous>, transform_indices = @transform_1, window_bounds = array<i64: 32, 32>}, {transform_indices = @transform_2, window_bounds = array<i64: 16, 32>}, {transform_indices = @transform_3, window_bounds = array<i64: 16, 32>}]} {
    %c0 = arith.constant 0 : index
    %c0_0 = arith.constant 0 : index
    %0 = vector.load %arg1[%c0, %c0_0] : memref<16x32xf32, #tpu.memory_space<vmem>>, vector<16x32xf32>
    %c0_1 = arith.constant 0 : index
    %c0_2 = arith.constant 0 : index
    %1 = vector.load %arg2[%c0_1, %c0_2] : memref<32x32xf32, #tpu.memory_space<vmem>>, vector<32x32xf32>
    %cst = arith.constant dense<0.000000e+00> : vector<16x32xf32>
    %2 = tpu.matmul %0, %1, %cst {dimension_numbers = #tpu.dot_dimension_numbers<[1], [0], [0], [1], [0, 0, 1, 1], [], []>} : vector<16x32xf32>, vector<32x32xf32>, vector<16x32xf32> -> vector<16x32xf32>
    %c0_3 = arith.constant 0 : index
    %c0_4 = arith.constant 0 : index
    %3 = vector.load %arg3[%c0_3, %c0_4] : memref<16x32xf32, #tpu.memory_space<vmem>>, vector<16x32xf32>
    tpu.vector_store %arg3[%c0_3, %c0_4], %2 {strides = array<i32>} : memref<16x32xf32, #tpu.memory_space<vmem>>, vector<16x32xf32>,
    %4 = arith.truncf %2 : vector<16x32xf32> to vector<16x32xbf16>
    %c0_5 = arith.constant 0 : index
    %c0_6 = arith.constant 0 : index
    %5 = vector.load %arg4[%c0_5, %c0_6] : memref<16x32xbf16, #tpu.memory_space<vmem>>, vector<16x32xbf16>
    tpu.vector_store %arg4[%c0_5, %c0_6], %4 {strides = array<i32>} : memref<16x32xbf16, #tpu.memory_space<vmem>>, vector<16x32xbf16>,
    return
  }
  func.func @transform_0(%arg0: i32) -> (i32, i32) {
    %c0_i32 = arith.constant 0 : i32
    %c0_i32_0 = arith.constant 0 : i32
    return %arg0, %c0_i32 : i32, i32
  }
  func.func @transform_1(%arg0: i32) -> (i32, i32) {
    %c0_i32 = arith.constant 0 : i32
    %c0_i32_0 = arith.constant 0 : i32
    %c0_i32_1 = arith.constant 0 : i32
    return %c0_i32, %c0_i32_0 : i32, i32
  }
  func.func @transform_2(%arg0: i32) -> (i32, i32) {
    %c0_i32 = arith.constant 0 : i32
    %c0_i32_0 = arith.constant 0 : i32
    return %arg0, %c0_i32 : i32, i32
  }
  func.func @transform_3(%arg0: i32) -> (i32, i32) {
    %c0_i32 = arith.constant 0 : i32
    %c0_i32_0 = arith.constant 0 : i32
    return %arg0, %c0_i32 : i32, i32
  }
}

module attributes {stable_mosaic.version = 11 : i64} {
  func.func @_neighbor_kernel(%arg0: i32, %arg1: i32, %arg2: memref<16x16xbf16, #tpu.memory_space<vmem>>, %arg3: memref<16x32xbf16, #tpu.memory_space<vmem>>, %arg4: memref<16x32xf32, #tpu.memory_space<vmem>>, %arg5: memref<16x64xf32, #tpu.memory_space<vmem>>, %arg6: memref<16x32xf32, #tpu.memory_space<vmem>>) attributes {dimension_semantics = [#tpu.dimension_semantics<parallel>, #tpu.dimension_semantics<arbitrary>], iteration_bounds = array<i64: 1, 1>, scalar_prefetch = 0 : i64, scratch_operands = 1 : i64, tpu.core_type = #tpu.core_type<tc>, window_params = [{transform_indices = @transform_0, window_bounds = array<i64: 16, 16>}, {transform_indices = @transform_1, window_bounds = array<i64: 16, 32>}, {transform_indices = @transform_2, window_bounds = array<i64: 16, 32>}, {transform_indices = @transform_3, window_bounds = array<i64: 16, 64>}]} {
    %c0_i32 = arith.constant 0 : i32
    %0 = arith.cmpi eq, %arg1, %c0_i32 : i32
    %1 = arith.extui %0 : i1 to i32
    %c0_i32_0 = arith.constant 0 : i32
    %2 = arith.cmpi ne, %1, %c0_i32_0 : i32
    scf.if %2 {
      %cst_10 = arith.constant 0.000000e+00 : f32
      %12 = vector.broadcast %cst_10 : f32 to vector<16x32xf32>
      %c0_11 = arith.constant 0 : index
      %c0_12 = arith.constant 0 : index
      %13 = vector.load %arg6[%c0_11, %c0_12] : memref<16x32xf32, #tpu.memory_space<vmem>>, vector<16x32xf32>
      tpu.vector_store %arg6[%c0_11, %c0_12], %12 {strides = array<i32>} : memref<16x32xf32, #tpu.memory_space<vmem>>, vector<16x32xf32>,
    } else {
    }
    %c0 = arith.constant 0 : index
    %c0_1 = arith.constant 0 : index
    %3 = vector.load %arg3[%c0, %c0_1] : memref<16x32xbf16, #tpu.memory_space<vmem>>, vector<16x32xbf16>
    %c0_2 = arith.constant 0 : index
    %c0_3 = arith.constant 0 : index
    %4 = vector.load %arg2[%c0_2, %c0_3] : memref<16x16xbf16, #tpu.memory_space<vmem>>, vector<16x16xbf16>
    %c0_4 = arith.constant 0 : index
    %c0_5 = arith.constant 0 : index
    %5 = vector.load %arg6[%c0_4, %c0_5] : memref<16x32xf32, #tpu.memory_space<vmem>>, vector<16x32xf32>
    %cst = arith.constant dense<0.000000e+00> : vector<16x32xf32>
    %6 = tpu.matmul %4, %3, %cst {dimension_numbers = #tpu.dot_dimension_numbers<[1], [0], [0], [1], [0, 0, 1, 1], [], []>} : vector<16x16xbf16>, vector<16x32xbf16>, vector<16x32xf32> -> vector<16x32xf32>
    %7 = arith.addf %5, %6 : vector<16x32xf32>
    %c0_6 = arith.constant 0 : index
    %c0_7 = arith.constant 0 : index
    %8 = vector.load %arg6[%c0_6, %c0_7] : memref<16x32xf32, #tpu.memory_space<vmem>>, vector<16x32xf32>
    tpu.vector_store %arg6[%c0_6, %c0_7], %7 {strides = array<i32>} : memref<16x32xf32, #tpu.memory_space<vmem>>, vector<16x32xf32>,
    %c0_i32_8 = arith.constant 0 : i32
    %9 = arith.cmpi eq, %arg1, %c0_i32_8 : i32
    %10 = arith.extui %9 : i1 to i32
    %c0_i32_9 = arith.constant 0 : i32
    %11 = arith.cmpi ne, %10, %c0_i32_9 : i32
    scf.if %11 {
      %c0_10 = arith.constant 0 : index
      %c0_11 = arith.constant 0 : index
      %12 = vector.load %arg4[%c0_10, %c0_11] : memref<16x32xf32, #tpu.memory_space<vmem>>, vector<16x32xf32>
      %c0_12 = arith.constant 0 : index
      %c0_13 = arith.constant 0 : index
      %13 = vector.load %arg5[%c0_12, %c0_13] : memref<16x64xf32, #tpu.memory_space<vmem>>, vector<16x32xf32>
      tpu.vector_store %arg5[%c0_12, %c0_13], %12 {strides = array<i32>} : memref<16x64xf32, #tpu.memory_space<vmem>>, vector<16x32xf32>,
      %c0_14 = arith.constant 0 : index
      %c0_15 = arith.constant 0 : index
      %14 = vector.load %arg6[%c0_14, %c0_15] : memref<16x32xf32, #tpu.memory_space<vmem>>, vector<16x32xf32>
      %c0_16 = arith.constant 0 : index
      %c32 = arith.constant 32 : index
      %15 = vector.load %arg5[%c0_16, %c32] : memref<16x64xf32, #tpu.memory_space<vmem>>, vector<16x32xf32>
      tpu.vector_store %arg5[%c0_16, %c32], %14 {strides = array<i32>} : memref<16x64xf32, #tpu.memory_space<vmem>>, vector<16x32xf32>,
    } else {
    }
    return
  }
  func.func @transform_0(%arg0: i32, %arg1: i32) -> (i32, i32) {
    %c0_i32 = arith.constant 0 : i32
    return %arg0, %arg1 : i32, i32
  }
  func.func @transform_1(%arg0: i32, %arg1: i32) -> (i32, i32) {
    %c0_i32 = arith.constant 0 : i32
    %c0_i32_0 = arith.constant 0 : i32
    return %arg1, %c0_i32 : i32, i32
  }
  func.func @transform_2(%arg0: i32, %arg1: i32) -> (i32, i32) {
    %c0_i32 = arith.constant 0 : i32
    %c0_i32_0 = arith.constant 0 : i32
    return %arg0, %c0_i32 : i32, i32
  }
  func.func @transform_3(%arg0: i32, %arg1: i32) -> (i32, i32) {
    %c0_i32 = arith.constant 0 : i32
    %c0_i32_0 = arith.constant 0 : i32
    return %arg0, %c0_i32 : i32, i32
  }
}

</mosaic_0001>

<llo_original>
// kernel: sage_layer.2
$region0: #{sage_layer.2}
  #allocation0 [shape = 'u32[]', space=smem, size = 0x4, offset = 0x4, fixed_abs, tag = 'smem constant byte address 0x4 - core index']
  #allocation1 [shape = 'u32[72,128]{1,0:T(1,128)}', space=vmem, size = 0x9000, scoped, tag = 'internal scratch']
  %s0 = inlined_call_operand.hbm [shape: f32[16,32], index: 0, kind: input, shape index: {}]
  %s1 = inlined_call_operand.hbm [shape: f32[32,32], index: 1, kind: input, shape index: {}]
  %s2 = inlined_call_operand.vmem [shape: f32[16,32], index: 2, kind: output, shape index: {0}]
  %s3 = inlined_call_operand.vmem [shape: bf16[16,32], index: 3, kind: output, shape index: {1}]
  %4 = xla_tuple %s2, %s3
  %s5 = sld [smem:[#allocation0]]
  $region34: #{sage_layer.2} parent=0
    _
  %s7 = ssub.s32 1, %s5
  %s8 = scalar_select 0, %s7, %s5
  $region1: #{sage_layer.2} parent=0
    #allocation2 [shape = 'u8[8192]{0}', space=vmem, size = 0x2000, scoped, tag = 'input window, operand 0, single buffered']
    #allocation3 [shape = 's32[1]{0}', space=sflag, size = 0x4, scoped, tag = 'scoped memory for sage_layer.2']
    #allocation4 [shape = 'u8[16384]{0}', space=vmem, size = 0x4000, scoped, tag = 'input window, operand 1, single buffered']
    #allocation5 [shape = 's32[1]{0}', space=sflag, size = 0x4, scoped, tag = 'scoped memory for sage_layer.2']
    %9 = vsyncpa [#allocation3], 0
    %10 = vsyncpa [#allocation5], 0
    // Predicated region
    $region2: #{sage_layer.2} parent=1 // pred_check
      _
    $region3: #{sage_layer.2} parent=1 // pred_check_branch
      %12 = sbr.rel (0) target = $region5
    $region4: #{sage_layer.2} parent=1 // pred_region
      %14 = vsyncadd [#allocation3], 0
      %s15 = sshll.u32 %s0, 4
      %s16 = int_to_ptr.hbm [resolvable:$true] %s15
      %s17 = sshll.u32 [#allocation2], 4
      %s18 = int_to_ptr.vmem [resolvable:$true] %s17
      %23 = dma.hbm_to_vmem [thread:$0]  %s16, 256, %s18, [#allocation3], 128, 128, 8
    $region5: #{sage_layer.2} parent=1 // pred_fallthru
      _
    // Predicated region
    $region6: #{sage_layer.2} parent=1 // pred_check
      _
    $region7: #{sage_layer.2} parent=1 // pred_check_branch
      %25 = sbr.rel (0) target = $region9
    $region8: #{sage_layer.2} parent=1 // pred_region
      %27 = vsyncadd [#allocation5], 0
      %s28 = sshll.u32 %s1, 4
      %s29 = int_to_ptr.hbm [resolvable:$true] %s28
      %s30 = sshll.u32 [#allocation4], 4
      %s31 = int_to_ptr.vmem [resolvable:$true] %s30
      %36 = dma.hbm_to_vmem [thread:$0]  %s29, 512, %s31, [#allocation5], 128, 128, 8
    $region9: #{sage_layer.2} parent=1 // pred_fallthru
      _
    // Predicated region
    $region10: #{sage_layer.2} parent=1 // pred_check
      _
    $region11: #{sage_layer.2} parent=1 // pred_check_branch
      %38 = sbr.rel (0) target = $region13
    $region12: #{sage_layer.2} parent=1 // pred_region
      %40 = dma.done [#allocation3], 256
    $region13: #{sage_layer.2} parent=1 // pred_fallthru
      _
    // Predicated region
    $region14: #{sage_layer.2} parent=1 // pred_check
      _
    $region15: #{sage_layer.2} parent=1 // pred_check_branch
      %42 = sbr.rel (0) target = $region17
    $region16: #{sage_layer.2} parent=1 // pred_region
      %44 = dma.done [#allocation5], 512
    $region17: #{sage_layer.2} parent=1 // pred_fallthru
      _
    %v45 = vld [vmem:[#allocation2] sm:$0xff]
    %v46 = vld [vmem:[#allocation2 + $0x8] sm:$0xff]
    %v47 = vld [vmem:[#allocation4] sm:$0xff]
    %v48 = vld [vmem:[#allocation4 + $0x8] sm:$0xff]
    %v49 = vld [vmem:[#allocation4 + $0x10] sm:$0xff]
    %v50 = vld [vmem:[#allocation4 + $0x18] sm:$0xff]
    %vm51 = vcmask 261120
    %v53 = vsel %vm51, %v45, 0
    %v56 = vsel %vm51, %v46, 0
    %58 = vmatpush.msra.mxu0 0.0
    %59 = vmatpush.msra.mxu0 0.0
    %60 = vmatpush.msra.mxu0 0.0
    %61 = vmatpush.msra.mxu0 0.0
    %62 = vmatpush.msra.mxu0 0.0
    %63 = vmatpush.msra.mxu0 0.0
    %64 = vmatpush.msra.mxu0 0.0
    %65 = vmatpush.msra.mxu0 0.0
    %66 = vmatpush.msra.mxu0 0.0
    %67 = vmatpush.msra.mxu0 0.0
    %68 = vmatpush.msra.mxu0 0.0
    %69 = vmatpush.msra.mxu0 0.0
    %70 = vmatpush.msra.mxu0 %v50
    %71 = vmatpush.msra.mxu0 %v49
    %72 = vmatpush.msra.mxu0 %v48
    %73 = vmatpush.msra.mxu0 %v47
    %74 = vmatmul.f32.gmra.mxu0 %v53
    %v75 = vpop.f32.mrf.mxu0
    %v76 = vadd.f32 0.0, %v75
    %77 = vmatmul.f32.gmra.mxu0 %v56
    %v78 = vpop.f32.mrf.mxu0
    %v79 = vadd.f32 0.0, %v78
    %80 = vdwg.mxu0
    %81 = vst.msk [vmem:[%s2] sm:$0xff] %vm51, %v76
    %82 = vst.msk [vmem:[%s2 + $0x8] sm:$0xff] %vm51, %v79
    %v83 = vpack.c.bf16 %v76, %v76
    %v84 = vpack.c.bf16 %v79, %v79
    %vm85 = vcmask 257024
    %86 = vst.msk [vmem:[%s3] sm:$0xf] %vm85, %v83
    %87 = vst.msk [vmem:[%s3 + $0x4] sm:$0xf] %vm85, %v84
    // Predicated region
    $region18: #{sage_layer.2} parent=1 // pred_check
      _
    $region19: #{sage_layer.2} parent=1 // pred_check_branch
      %89 = sbr.rel (0) target = $region21
    $region20: #{sage_layer.2} parent=1 // pred_region
      _
    $region21: #{sage_layer.2} parent=1 // pred_fallthru
      _
    // Predicated region
    $region22: #{sage_layer.2} parent=1 // pred_check
      _
    $region23: #{sage_layer.2} parent=1 // pred_check_branch
      %91 = sbr.rel (0) target = $region25
    $region24: #{sage_layer.2} parent=1 // pred_region
      _
    $region25: #{sage_layer.2} parent=1 // pred_fallthru
      _
    // Predicated region
    $region26: #{sage_layer.2} parent=1 // pred_check
      _
    $region27: #{sage_layer.2} parent=1 // pred_check_branch
      %93 = sbr.rel (0) target = $region29
    $region28: #{sage_layer.2} parent=1 // pred_region
      _
    $region29: #{sage_layer.2} parent=1 // pred_fallthru
      _
    // Predicated region
    $region30: #{sage_layer.2} parent=1 // pred_check
      _
    $region31: #{sage_layer.2} parent=1 // pred_check_branch
      %95 = sbr.rel (0) target = $region33
    $region32: #{sage_layer.2} parent=1 // pred_region
      _
    $region33: #{sage_layer.2} parent=1 // pred_fallthru
      _
    %96 = vsyncpa [#allocation3], 1
    %97 = vsyncpa [#allocation5], 1

// kernel: sage_layer.3
$region0: #{sage_layer.3}
  #allocation0 [shape = 'u32[]', space=smem, size = 0x4, offset = 0x4, fixed_abs, tag = 'smem constant byte address 0x4 - core index']
  #allocation1 [shape = 'u32[72,128]{1,0:T(1,128)}', space=vmem, size = 0x9000, scoped, tag = 'internal scratch']
  #allocation2 [shape = 'f32[16,32]{1,0:T(8,128)}', space=vmem, size = 0x2000, scoped, tag = 'scratch operand']
  %s0 = inlined_call_operand.hbm [shape: bf16[16,16], index: 0, kind: input, shape index: {}]
  %s1 = inlined_call_operand.vmem [shape: bf16[16,32], index: 1, kind: input, shape index: {}]
  %s2 = inlined_call_operand.vmem [shape: f32[16,32], index: 2, kind: input, shape index: {}]
  %s3 = inlined_call_operand.hbm [shape: f32[16,64], index: 3, kind: output, shape index: {}]
  %s4 = sld [smem:[#allocation0]]
  $region34: #{sage_layer.3} parent=0
    _
  %s6 = ssub.s32 1, %s4
  %s7 = scalar_select 0, %s6, %s4
  $region1: #{sage_layer.3} parent=0
    #allocation3 [shape = 'u8[4096]{0}', space=vmem, size = 0x1000, scoped, tag = 'input window, operand 0, single buffered']
    #allocation4 [shape = 's32[1]{0}', space=sflag, size = 0x4, scoped, tag = 'scoped memory for sage_layer.3']
    #allocation5 [shape = 's32[1]{0}', space=sflag, size = 0x4, scoped, tag = 'scoped memory for sage_layer.3']
    #allocation6 [shape = 'u8[8192]{0}', space=vmem, size = 0x2000, scoped, tag = 'output window, operand 0, single buffered']
    %8 = vsyncpa [#allocation4], 0
    %9 = vsyncpa [#allocation5], 0
    // Predicated region
    $region2: #{sage_layer.3} parent=1 // pred_check
      _
    $region3: #{sage_layer.3} parent=1 // pred_check_branch
      %11 = sbr.rel (0) target = $region5
    $region4: #{sage_layer.3} parent=1 // pred_region
      %13 = vsyncadd [#allocation4], 0
      %s14 = sshll.u32 %s0, 4
      %s15 = int_to_ptr.hbm [resolvable:$true] %s14
      %s16 = sshll.u32 [#allocation3], 4
      %s17 = int_to_ptr.vmem [resolvable:$true] %s16
      %22 = dma.hbm_to_vmem [thread:$0]  %s15, 128, %s17, [#allocation4], 64, 64, 4
    $region5: #{sage_layer.3} parent=1 // pred_fallthru
      _
    // Predicated region
    $region6: #{sage_layer.3} parent=1 // pred_check
      _
    $region7: #{sage_layer.3} parent=1 // pred_check_branch
      %24 = sbr.rel (0) target = $region9
    $region8: #{sage_layer.3} parent=1 // pred_region
      _
    $region9: #{sage_layer.3} parent=1 // pred_fallthru
      _
    // Predicated region
    $region10: #{sage_layer.3} parent=1 // pred_check
      _
    $region11: #{sage_layer.3} parent=1 // pred_check_branch
      %26 = sbr.rel (0) target = $region13
    $region12: #{sage_layer.3} parent=1 // pred_region
      _
    $region13: #{sage_layer.3} parent=1 // pred_fallthru
      _
    // Predicated region
    $region14: #{sage_layer.3} parent=1 // pred_check
      _
    $region15: #{sage_layer.3} parent=1 // pred_check_branch
      %28 = sbr.rel (0) target = $region17
    $region16: #{sage_layer.3} parent=1 // pred_region
      %30 = dma.done [#allocation4], 128
    $region17: #{sage_layer.3} parent=1 // pred_fallthru
      _
    %p32 = scmp.eq.s32.totalorder 0, 0
    // Predicated region
    $region18: #{sage_layer.3} parent=1 // pred_check
      %p33 = pneg %p32
    $region19: #{sage_layer.3} parent=1 // pred_check_branch
      %35 = sbr.rel (%p33) target = $region21
    $region20: #{sage_layer.3} parent=1 // pred_region
      %vm36 = vcmask 261120
      %37 = vst.msk [vmem:[#allocation2] sm:$0xff] %vm36, 0.0
      %38 = vst.msk [vmem:[#allocation2 + $0x8] sm:$0xff] %vm36, 0.0
    $region21: #{sage_layer.3} parent=1 // pred_fallthru
      _
    %v39 = vld [vmem:[%s1] sm:$0xf]
    %v40 = vld [vmem:[%s1 + $0x4] sm:$0xf]
    %v41 = vld [vmem:[#allocation3] sm:$0xf]
    %v42 = vld [vmem:[#allocation3 + $0x4] sm:$0xf]
    %v43 = vld [vmem:[#allocation2] sm:$0xff]
    %v44 = vld [vmem:[#allocation2 + $0x8] sm:$0xff]
    %v47 = vunpack.c.l.b16 %v41
    %v48 = vunpack.c.l.b16 %v42
    %v49 = vpack.c.b16 %v48, %v47
    %v52 = vunpack.c.l.b16 %v39
    %v53 = vunpack.c.l.b16 %v40
    %v54 = vpack.c.b16 %v53, %v52
    %vm56 = vcmask 130048
    %v58 = vsel %vm56, %v49, 0
    %60 = vmatpush.bf16.msra.mxu0 0
    %61 = vmatpush.bf16.msra.mxu0 0
    %62 = vmatpush.bf16.msra.mxu0 0
    %63 = vmatpush.bf16.msra.mxu0 0
    %64 = vmatpush.bf16.msra.mxu0 0
    %65 = vmatpush.bf16.msra.mxu0 0
    %66 = vmatpush.bf16.msra.mxu0 0
    %67 = vmatpush.bf16.msra.mxu0 %v54
    %68 = vmatmul.bf16.gmra.mxu0 %v58
    %v69 = vpop.f32.mrf.mxu0
    %v70 = vadd.f32 0.0, %v69
    %v71 = vpop.f32.mrf.mxu0
    %v72 = vadd.f32 0.0, %v71
    %73 = vdwg.mxu0
    %v74 = vadd.f32 %v43, %v70
    %v75 = vadd.f32 %v44, %v72
    %vm76 = vcmask 261120
    %77 = vst.msk [vmem:[#allocation2] sm:$0xff] %vm76, %v74
    %78 = vst.msk [vmem:[#allocation2 + $0x8] sm:$0xff] %vm76, %v75
    // Predicated region
    $region22: #{sage_layer.3} parent=1 // pred_check
      %p79 = pneg %p32
    $region23: #{sage_layer.3} parent=1 // pred_check_branch
      %81 = sbr.rel (%p79) target = $region25
    $region24: #{sage_layer.3} parent=1 // pred_region
      %v82 = vld [vmem:[%s2] sm:$0xff]
      %v83 = vld [vmem:[%s2 + $0x8] sm:$0xff]
      %84 = vst.msk [vmem:[#allocation6] sm:$0xff] %vm76, %v82
      %85 = vst.msk [vmem:[#allocation6 + $0x8] sm:$0xff] %vm76, %v83
      %v86 = vld [vmem:[#allocation2] sm:$0xff]
      %v87 = vld [vmem:[#allocation2 + $0x8] sm:$0xff]
      %90 = vrot.lane.b32.xlu0 %v86, 32
      %v91 = vpop.permute.xlu0 %90
      %92 = vrot.lane.b32.xlu0 %v87, 32
      %v93 = vpop.permute.xlu0 %92
      %vm96 = vcmask 523520
      %97 = vst.msk [vmem:[#allocation6] sm:$0xff] %vm96, %v91
      %98 = vst.msk [vmem:[#allocation6 + $0x8] sm:$0xff] %vm96, %v93
    $region25: #{sage_layer.3} parent=1 // pred_fallthru
      _
    // Predicated region
    $region26: #{sage_layer.3} parent=1 // pred_check
      _
    $region27: #{sage_layer.3} parent=1 // pred_check_branch
      %100 = sbr.rel (0) target = $region29
    $region28: #{sage_layer.3} parent=1 // pred_region
      %102 = vsyncadd [#allocation5], 0
      %s103 = sshll.u32 [#allocation6], 4
      %s104 = int_to_ptr.vmem [resolvable:$true] %s103
      %s105 = sshll.u32 %s3, 4
      %s106 = int_to_ptr.hbm [resolvable:$true] %s105
      %111 = dma.vmem_to_hbm [thread:$0]  %s104, 256, %s106, [#allocation5], 128, 128, 8
    $region29: #{sage_layer.3} parent=1 // pred_fallthru
      _
    // Predicated region
    $region30: #{sage_layer.3} parent=1 // pred_check
      _
    $region31: #{sage_layer.3} parent=1 // pred_check_branch
      %113 = sbr.rel (0) target = $region33
    $region32: #{sage_layer.3} parent=1 // pred_region
      %115 = dma.done [#allocation5], 256
    $region33: #{sage_layer.3} parent=1 // pred_fallthru
      _
    %116 = vsyncpa [#allocation4], 1
    %117 = vsyncpa [#allocation5], 1

</llo_original>
